<compile_context>
chip_gen: v7x
topology: tpu7x:2x2x1
jax: 0.10.0
libtpu: 0.0.40
codegen_flags: <defaults>
</compile_context>

<pallas_src>
import functools

import jax
import jax.numpy as jnp
from jax.experimental import pallas as pl
from jax.experimental.pallas import tpu as pltpu


def _round_up(x: int, m: int) -> int:
    return ((x + m - 1) // m) * m


def _default_tiles():
    """Per-generation (tm, tn, tk) defaults.

    Arithmetic intensity of this output-stationary scheme is roughly
    tm*tn/(tm + tn) bf16-flops per HBM byte; bigger output tiles move the
    kernel from the HBM roofline onto the MXU roofline.
    """
    kind = ""
    try:
        kind = jax.devices()[0].device_kind.lower()
    except Exception:  # defensive: fall back to conservative tiles below
        pass
    if "v6" in kind:
        # 128 MiB VMEM; needs AI ~650 flops/byte to reach 918 TF/s.
        return 1024, 2048, 512
    if "v7" in kind:
        # 64 MiB VMEM per TensorCore, 3.2 TB/s HBM -> AI ~310 is enough.
        return 512, 1024, 512
    # v5e (16 MiB scoped-VMEM default, ~240 flops/byte threshold) and any
    # unknown generation: conservative tiles that are already compute-bound.
    return 512, 512, 512


def _pick_tile(dim: int, tile_max: int, align: int) -> int:
    """Largest tile <= tile_max (multiple of `align`) with minimal padding.

    Prefers a tile that divides the alignment-padded dim exactly, so the grid
    never multiplies by more than the unavoidable (align-1) pad rows/cols.
    """
    padded = _round_up(dim, align)
    tile_max = max(align, (min(tile_max, padded) // align) * align)
    t = tile_max
    while padded % t:
        t -= align
    # Awkward dims (e.g. large prime multiples of `align`): accept padding
    # rather than collapsing to a tiny tile that tanks arithmetic intensity.
    if t < tile_max // 4 and t != padded:
        return tile_max
    return t


def _vmem_bytes(tm, tn, tk, x_bytes, w_bytes, o_bytes):
    return (2 * tm * tk * x_bytes      # double-buffered x tiles
            + 2 * tk * tn * w_bytes    # double-buffered weight tiles
            + 2 * tm * tn * o_bytes    # double-buffered output tiles
            + tm * tn * 4)             # f32 accumulator scratch


def prepare_weight(weight):
    """One-time weight prep: torch layout (N, K) -> kernel layout (K, N) bf16.

    Done once at "module init" time (like nn.Linear holding its weight), not
    per forward call: no per-call cast/transpose HBM pass, and the kernel runs
    the canonical (tm,tk)@(tk,tn) matmul on every generation.
    """
    return jnp.asarray(weight, jnp.bfloat16).T


def _linear_kernel(x_ref, w_ref, o_ref, acc_ref):
    """Computes one (tm, tn) output tile; grid axis 2 is the K reduction."""

    @pl.when(pl.program_id(2) == 0)
    def _init():
        acc_ref[...] = jnp.zeros_like(acc_ref)

    # x tile may arrive in the caller's dtype (small-batch path); the cast to
    # bf16 is a cheap VPU op here and a no-op if the wrapper already cast.
    acc_ref[...] += jnp.dot(
        x_ref[...].astype(jnp.bfloat16),
        w_ref[...],
        preferred_element_type=jnp.float32,
    )

    @pl.when(pl.program_id(2) == pl.num_programs(2) - 1)
    def _finalize():
        o_ref[...] = acc_ref[...].astype(o_ref.dtype)


@functools.partial(jax.jit, static_argnames=("out_dtype", "tm", "tn", "tk"))
def linear_forward(x, w_kn, *, out_dtype=jnp.bfloat16, tm=None, tn=None, tk=None):
    """y = x @ weight.T for torch.nn.Linear(bias=False).

    x:    (M, K) = (batch, in_features), any float dtype.
    w_kn: (K, N) bf16 weight from `prepare_weight` (torch weight, transposed).
    """
    M, K = x.shape
    Kw, N = w_kn.shape
    assert K == Kw, (x.shape, w_kn.shape)

    dtm, dtn, dtk = _default_tiles()
    tm = _pick_tile(M, tm or dtm, 8)      # sublane axis: multiple of 8
    tn = _pick_tile(N, tn or dtn, 128)    # lane axis: multiple of 128
    tk = _pick_tile(K, tk or dtk, 128)    # lane axis: multiple of 128

    # Megacore (v7x: 2 TensorCores): expose >= 2 tiles on the parallel (M, N)
    # grid axes so both cores get work; at most ~0.35us/step extra elsewhere.
    def n_parallel(tm_, tn_):
        return (_round_up(M, tm_) // tm_) * (_round_up(N, tn_) // tn_)

    while n_parallel(tm, tn) < 2:
        if tn > 128:
            tn = max(128, (tn // 2) // 128 * 128)
        elif tm > 8:
            tm = max(8, (tm // 2) // 8 * 8)
        else:
            break

    Mp, Np, Kp = _round_up(M, tm), _round_up(N, tn), _round_up(K, tk)

    # Pre-cast x only when each x tile is re-read >= 3 times along N so the
    # extra HBM pass pays for itself; otherwise the kernel casts per tile.
    if x.dtype != jnp.bfloat16 and (Np // tn) >= 3:
        x = x.astype(jnp.bfloat16)

    if (Mp, Kp) != (M, K):
        x = jnp.pad(x, ((0, Mp - M), (0, Kp - K)))
    if (Kp, Np) != (K, N):
        w_kn = jnp.pad(w_kn, ((0, Kp - K), (0, Np - N)))

    grid = (Mp // tm, Np // tn, Kp // tk)

    vmem_limit = min(
        64 << 20,
        max(32 << 20,
            int(1.5 * _vmem_bytes(tm, tn, tk,
                                  x.dtype.itemsize, w_kn.dtype.itemsize,
                                  jnp.dtype(out_dtype).itemsize))),
    )

    out = pl.pallas_call(
        _linear_kernel,
        out_shape=jax.ShapeDtypeStruct((Mp, Np), out_dtype),
        grid_spec=pltpu.PrefetchScalarGridSpec(
            num_scalar_prefetch=0,
            grid=grid,
            in_specs=[
                # x tile depends on (i, k) only -> resident across the N axis.
                pl.BlockSpec((tm, tk), lambda i, j, k: (i, k)),
                # weight tile in (K, N) layout -> canonical matmul operand.
                pl.BlockSpec((tk, tn), lambda i, j, k: (k, j)),
            ],
            out_specs=pl.BlockSpec((tm, tn), lambda i, j, k: (i, j)),
            scratch_shapes=[pltpu.VMEM((tm, tn), jnp.float32)],
        ),
        compiler_params=pltpu.CompilerParams(
            dimension_semantics=("parallel", "parallel", "arbitrary"),
            vmem_limit_bytes=vmem_limit,
        ),
    )(x, w_kn)

    if (Mp, Np) != (M, N):
        out = out[:M, :N]
    return out


if __name__ == "__main__":
    key = jax.random.PRNGKey(0)
    kx, kw = jax.random.split(key)

    # input_shape = [out_features, in_features]; forward input is (batch, in).
    out_features, in_features = 128, 256
    batch = 32

    # Mirrors `torch.randn(input_shape) - 0.5` (same distribution, JAX RNG).
    weight = jax.random.normal(kw, (out_features, in_features), jnp.float32) - 0.5
    x = jax.random.normal(kx, (batch, in_features), jnp.float32)

    # One-time "module init" style weight preparation (bf16, (K, N) layout).
    w_kn = prepare_weight(weight)

    # Default per-generation tiling path (bf16 output).
    y = jax.block_until_ready(linear_forward(x, w_kn))

    # Explicit small tiles: exercises a multi-step K reduction and the f32
    # accumulator init/finalize path.
    y_small = jax.block_until_ready(linear_forward(x, w_kn, tm=16, tn=128, tk=128))

    # f32 output path (matches torch's output dtype when exact dtype matters).
    y_f32 = jax.block_until_ready(linear_forward(x, w_kn, out_dtype=jnp.float32))

    y_ref = x @ weight.T
    assert y.shape == (batch, out_features)
    scale = float(jnp.max(jnp.abs(y_ref)))
    tol = 2e-2 * scale  # bf16 operands (and bf16 output by default)

    err = float(jnp.max(jnp.abs(y.astype(jnp.float32) - y_ref)))
    assert err <= tol, err
    err_small = float(jnp.max(jnp.abs(y_small.astype(jnp.float32) - y_ref)))
    assert err_small <= tol, err_small
    err_f32 = float(jnp.max(jnp.abs(y_f32 - y_ref)))
    assert err_f32 <= tol, err_f32

    print("KERNEL_OK")
</pallas_src>

<mosaic_0001>
module attributes {stable_mosaic.version = 11 : i64} {
  func.func @_linear_kernel(%arg0: i32, %arg1: i32, %arg2: i32, %arg3: memref<16x256xf32, #tpu.memory_space<vmem>>, %arg4: memref<256x128xbf16, #tpu.memory_space<vmem>>, %arg5: memref<16x128xbf16, #tpu.memory_space<vmem>>, %arg6: memref<16x128xf32, #tpu.memory_space<vmem>>) attributes {dimension_semantics = [#tpu.dimension_semantics<parallel>, #tpu.dimension_semantics<parallel>, #tpu.dimension_semantics<arbitrary>], iteration_bounds = array<i64: 2, 1, 1>, scalar_prefetch = 0 : i64, scratch_operands = 1 : i64, tpu.core_type = #tpu.core_type<tc>, window_params = [{transform_indices = @transform_0, window_bounds = array<i64: 16, 256>}, {transform_indices = @transform_1, window_bounds = array<i64: 256, 128>}, {transform_indices = @transform_2, window_bounds = array<i64: 16, 128>}]} {
    %c0_i32 = arith.constant 0 : i32
    %0 = arith.cmpi eq, %arg2, %c0_i32 : i32
    %1 = arith.extui %0 : i1 to i32
    %c0_i32_0 = arith.constant 0 : i32
    %2 = arith.cmpi ne, %1, %c0_i32_0 : i32
    scf.if %2 {
      %cst_10 = arith.constant 0.000000e+00 : f32
      %13 = vector.broadcast %cst_10 : f32 to vector<16x128xf32>
      %c0_11 = arith.constant 0 : index
      %c0_12 = arith.constant 0 : index
      %14 = vector.load %arg6[%c0_11, %c0_12] : memref<16x128xf32, #tpu.memory_space<vmem>>, vector<16x128xf32>
      tpu.vector_store %arg6[%c0_11, %c0_12], %13 {strides = array<i32>} : memref<16x128xf32, #tpu.memory_space<vmem>>, vector<16x128xf32>,
    } else {
    }
    %c0 = arith.constant 0 : index
    %c0_1 = arith.constant 0 : index
    %3 = vector.load %arg6[%c0, %c0_1] : memref<16x128xf32, #tpu.memory_space<vmem>>, vector<16x128xf32>
    %c0_2 = arith.constant 0 : index
    %c0_3 = arith.constant 0 : index
    %4 = vector.load %arg3[%c0_2, %c0_3] : memref<16x256xf32, #tpu.memory_space<vmem>>, vector<16x256xf32>
    %5 = arith.truncf %4 : vector<16x256xf32> to vector<16x256xbf16>
    %c0_4 = arith.constant 0 : index
    %c0_5 = arith.constant 0 : index
    %6 = vector.load %arg4[%c0_4, %c0_5] : memref<256x128xbf16, #tpu.memory_space<vmem>>, vector<256x128xbf16>
    %cst = arith.constant dense<0.000000e+00> : vector<16x128xf32>
    %7 = tpu.matmul %5, %6, %cst {dimension_numbers = #tpu.dot_dimension_numbers<[1], [0], [0], [1], [0, 0, 1, 1], [], []>} : vector<16x256xbf16>, vector<256x128xbf16>, vector<16x128xf32> -> vector<16x128xf32>
    %8 = arith.addf %3, %7 : vector<16x128xf32>
    %c0_6 = arith.constant 0 : index
    %c0_7 = arith.constant 0 : index
    %9 = vector.load %arg6[%c0_6, %c0_7] : memref<16x128xf32, #tpu.memory_space<vmem>>, vector<16x128xf32>
    tpu.vector_store %arg6[%c0_6, %c0_7], %8 {strides = array<i32>} : memref<16x128xf32, #tpu.memory_space<vmem>>, vector<16x128xf32>,
    %c0_i32_8 = arith.constant 0 : i32
    %10 = arith.cmpi eq, %arg2, %c0_i32_8 : i32
    %11 = arith.extui %10 : i1 to i32
    %c0_i32_9 = arith.constant 0 : i32
    %12 = arith.cmpi ne, %11, %c0_i32_9 : i32
    scf.if %12 {
      %c0_10 = arith.constant 0 : index
      %c0_11 = arith.constant 0 : index
      %13 = vector.load %arg6[%c0_10, %c0_11] : memref<16x128xf32, #tpu.memory_space<vmem>>, vector<16x128xf32>
      %14 = arith.truncf %13 : vector<16x128xf32> to vector<16x128xbf16>
      %c0_12 = arith.constant 0 : index
      %c0_13 = arith.constant 0 : index
      %15 = vector.load %arg5[%c0_12, %c0_13] : memref<16x128xbf16, #tpu.memory_space<vmem>>, vector<16x128xbf16>
      tpu.vector_store %arg5[%c0_12, %c0_13], %14 {strides = array<i32>} : memref<16x128xbf16, #tpu.memory_space<vmem>>, vector<16x128xbf16>,
    } else {
    }
    return
  }
  func.func @transform_0(%arg0: i32, %arg1: i32, %arg2: i32) -> (i32, i32) {
    %c0_i32 = arith.constant 0 : i32
    return %arg0, %arg2 : i32, i32
  }
  func.func @transform_1(%arg0: i32, %arg1: i32, %arg2: i32) -> (i32, i32) {
    %c0_i32 = arith.constant 0 : i32
    return %arg2, %arg1 : i32, i32
  }
  func.func @transform_2(%arg0: i32, %arg1: i32, %arg2: i32) -> (i32, i32) {
    %c0_i32 = arith.constant 0 : i32
    return %arg0, %arg1 : i32, i32
  }
}

</mosaic_0001>

<llo_original>
// kernel: linear_forward.1
$region0: #{linear_forward.1}
  #allocation0 [shape = 'u32[]', space=smem, size = 0x4, offset = 0x4, fixed_abs, tag = 'smem constant byte address 0x4 - core index']
  #allocation1 [shape = 'u32[144,128]{1,0:T(1,128)}', space=vmem, size = 0x12000, scoped, tag = 'internal scratch']
  #allocation2 [shape = 'f32[16,128]{1,0:T(8,128)}', space=vmem, size = 0x2000, scoped, tag = 'scratch operand']
  %s0 = inlined_call_operand.hbm [shape: f32[32,256], index: 0, kind: input, shape index: {}]
  %s1 = inlined_call_operand.hbm [shape: bf16[256,128], index: 1, kind: input, shape index: {}]
  %s2 = inlined_call_operand.hbm [shape: bf16[32,128], index: 2, kind: output, shape index: {}]
  %s3 = sld [smem:[#allocation0]]
  $region57: #{linear_forward.1} parent=0
    _
  %s5 = ssub.s32 1, %s3
  %s6 = scalar_select 0, %s5, %s3
  $region1: #{linear_forward.1} parent=0
    #allocation3 [shape = 'u8[32768]{0}', space=vmem, size = 0x8000, scoped, tag = 'input window, operand 0']
    #allocation4 [shape = 's32[2]{0}', space=sflag, size = 0x8, scoped, tag = 'scoped memory for linear_forward.1']
    #allocation5 [shape = 's32[2]{0}', space=sflag, size = 0x8, scoped, tag = 'scoped memory for linear_forward.1']
    #allocation6 [shape = 'u8[65536]{0}', space=vmem, size = 0x10000, scoped, tag = 'input window, operand 1, single buffered']
    #allocation7 [shape = 's32[1]{0}', space=sflag, size = 0x4, scoped, tag = 'scoped memory for linear_forward.1']
    #allocation8 [shape = 'u8[8192]{0}', space=vmem, size = 0x2000, scoped, tag = 'output window, operand 0']
    %7 = vsyncpa [#allocation4], 0
    %s8 = scalar_lea.sflag [#allocation4], 1
    %9 = vsyncpa %s8, 0
    %10 = vsyncpa [#allocation7], 0
    %11 = vsyncpa [#allocation5], 0
    %s12 = scalar_lea.sflag [#allocation5], 1
    %13 = vsyncpa %s12, 0
    loop: start=0, step=1, limit=4
    $region2: #{linear_forward.1} parent=1 // loop_pre_header
      _
    $region3: #{linear_forward.1} parent=1 // loop_header
      %s15 = sphi 0, %s19
      %p16 = scmp.ge.s32.totalorder %s15, 4
      %s22 = sphi 0, %s41
      %s23 = sphi 0, %s37
      %s24 = sphi 0, %s33
      %s25 = sphi 0, %s22
      %s26 = sphi 0, %s23
      %s27 = sphi 0, %s24
      %s28 = sphi 0, %s25
      %s29 = sphi 0, %s26
      %s30 = sphi 0, %s27
      %s46 = sphi 0, %s48
      %s49 = sphi 0, %s46
      %s50 = sphi 0, %s49
      %s66 = sphi 0, %s50
      %s74 = sphi 0, %s76
      %s77 = sphi 0, %s74
      %s78 = sphi 0, %s77
      %s94 = sphi 0, %s78
      %s102 = sphi 0, %s104
      %s105 = sphi 0, %s102
      %s106 = sphi 0, %s105
      %s122 = sphi 0, %s106
    $region4: #{linear_forward.1} parent=1 // loop_header_branch
      %18 = sbr.rel (%p16) target = $region8
    $region5: #{linear_forward.1} parent=1 // loop_body
      %s20 = ssub.s32 %s15, 1
      %s21 = ssub.s32 %s15, 2
      %s31 = sadd.s32 1, %s24
      %p32 = scmp.ge.s32.totalorder %s31, 1
      %s33 = scalar_select %p32, 0, %s31
      %s34 = sadd.s32 1, %s23
      %s35 = scalar_select %p32, %s34, %s23
      %p36 = scmp.ge.s32.totalorder %s35, 1
      %s37 = scalar_select %p36, 0, %s35
      %s38 = sadd.s32 1, %s22
      %s39 = scalar_select %p36, %s38, %s22
      %p40 = scmp.ge.s32.totalorder %s39, 2
      %s41 = scalar_select %p40, 0, %s39
      %s42 = ssub.s32 %s22, %s41
      %s43 = ssub.s32 %s24, %s33
      %s44 = sor.u32 %s42, %s43
      %p45 = scmp.eq.s32.totalorder %s44, 0
      %s47 = sadd.s32 %s46, 1
      %s48 = scalar_select %p45, %s46, %s47
      %p51 = pneg %p45
      %p52 = scmp.eq.s32.totalorder %s15, 1
      %p53 = por %p51, %p52
      %p54 = scmp.ne.s32.totalorder %s46, %s49
      %p55 = scmp.eq.s32.totalorder %s15, 0
      %p56 = por %p54, %p55
      %p57 = scmp.ne.s32.totalorder %s46, %s49
      %p58 = scmp.eq.s32.totalorder %s20, 1
      %p59 = por %p57, %p58
      %p60 = scmp.ne.s32.totalorder %s49, %s50
      %p61 = scmp.eq.s32.totalorder %s20, 0
      %p62 = por %p60, %p61
      %p63 = scmp.ne.s32.totalorder %s49, %s50
      %p64 = scmp.eq.s32.totalorder %s21, 1
      %p65 = por %p63, %p64
      %p67 = scmp.ne.s32.totalorder %s50, %s66
      %p68 = scmp.eq.s32.totalorder %s21, 0
      %p69 = por %p67, %p68
      %s70 = ssub.s32 %s24, %s33
      %s71 = ssub.s32 %s23, %s37
      %s72 = sor.u32 %s70, %s71
      %p73 = scmp.eq.s32.totalorder %s72, 0
      %s75 = sadd.s32 %s74, 1
      %s76 = scalar_select %p73, %s74, %s75
      %p79 = pneg %p73
      %p80 = scmp.eq.s32.totalorder %s15, 1
      %p81 = por %p79, %p80
      %p82 = scmp.ne.s32.totalorder %s74, %s77
      %p83 = scmp.eq.s32.totalorder %s15, 0
      %p84 = por %p82, %p83
      %p85 = scmp.ne.s32.totalorder %s74, %s77
      %p86 = scmp.eq.s32.totalorder %s20, 1
      %p87 = por %p85, %p86
      %p88 = scmp.ne.s32.totalorder %s77, %s78
      %p89 = scmp.eq.s32.totalorder %s20, 0
      %p90 = por %p88, %p89
      %p91 = scmp.ne.s32.totalorder %s77, %s78
      %p92 = scmp.eq.s32.totalorder %s21, 1
      %p93 = por %p91, %p92
      %p95 = scmp.ne.s32.totalorder %s78, %s94
      %p96 = scmp.eq.s32.totalorder %s21, 0
      %p97 = por %p95, %p96
      %s98 = ssub.s32 %s22, %s41
      %s99 = ssub.s32 %s23, %s37
      %s100 = sor.u32 %s98, %s99
      %p101 = scmp.eq.s32.totalorder %s100, 0
      %s103 = sadd.s32 %s102, 1
      %s104 = scalar_select %p101, %s102, %s103
      %p107 = pneg %p101
      %p108 = scmp.eq.s32.totalorder %s15, 1
      %p109 = por %p107, %p108
      %p110 = scmp.ne.s32.totalorder %s102, %s105
      %p111 = scmp.eq.s32.totalorder %s15, 0
      %p112 = por %p110, %p111
      %p113 = scmp.ne.s32.totalorder %s102, %s105
      %p114 = scmp.eq.s32.totalorder %s20, 1
      %p115 = por %p113, %p114
      %p116 = scmp.ne.s32.totalorder %s105, %s106
      %p117 = scmp.eq.s32.totalorder %s20, 0
      %p118 = por %p116, %p117
      %p119 = scmp.ne.s32.totalorder %s105, %s106
      %p120 = scmp.eq.s32.totalorder %s21, 1
      %p121 = por %p119, %p120
      %p123 = scmp.ne.s32.totalorder %s106, %s122
      %p124 = scmp.eq.s32.totalorder %s21, 0
      %p125 = por %p123, %p124
      %p126 = scmp.le.s32.totalorder 1, %s15
      %p127 = scmp.lt.s32.totalorder %s15, 3
      %p128 = pnand %p126, %p127
      %p129 = pneg %p128
      // Predicated region
      $region9: #{linear_forward.1} parent=5 // pred_check
        _
      $region10: #{linear_forward.1} parent=5 // pred_check_branch
        %131 = sbr.rel (%p128) target = $region12
      $region11: #{linear_forward.1} parent=5 // pred_region
        %s132 = ssub.s32 %s15, 1
        // Predicated region
        $region13: #{linear_forward.1} parent=11 // pred_check
          %p133 = pneg %p90
        $region14: #{linear_forward.1} parent=11 // pred_check_branch
          %135 = sbr.rel (%p133) target = $region16
        $region15: #{linear_forward.1} parent=11 // pred_region
          %s136 = smul.u32 32, %s27
          %s138 = ssub.s32 2048, 2048
          %139 = vsyncadd [#allocation7], %s138
          %s140 = sadd.s32 %s26, %s136
          %s141 = smul.addr %s140, 64
          %s142 = scalar_lea.hbm %s1, %s141
          %s143 = sshll.u32 [#allocation6], 4
          %s144 = int_to_ptr.vmem [resolvable:$true] %s143
          %149 = dma.hbm_to_vmem [thread:$0]  %s142, 2048, %s144, [#allocation7], 64, 64, 4
        $region16: #{linear_forward.1} parent=11 // pred_fallthru
          _
      $region12: #{linear_forward.1} parent=5 // pred_fallthru
        _
      %p150 = scmp.lt.s32.totalorder %s15, 2
      // Predicated region
      $region17: #{linear_forward.1} parent=5 // pred_check
        %p151 = pneg %p150
      $region18: #{linear_forward.1} parent=5 // pred_check_branch
        %153 = sbr.rel (%p151) target = $region20
      $region19: #{linear_forward.1} parent=5 // pred_region
        // Predicated region
        $region21: #{linear_forward.1} parent=19 // pred_check
          %p154 = pneg %p56
        $region22: #{linear_forward.1} parent=19 // pred_check_branch
          %156 = sbr.rel (%p154) target = $region24
        $region23: #{linear_forward.1} parent=19 // pred_region
          %s157 = sand.u32 %s46, 1
          %s158 = scalar_lea.sflag [#allocation4], %s157
          %s159 = sand.u32 %s46, 1
          %s160 = smul.addr %s159, 32
          %s161 = scalar_lea.vmem [#allocation3], %s160
          %s162 = smul.u32 2, %s22
          %s163 = smul.u32 2, %s24
          %s165 = ssub.s32 512, 512
          %166 = vsyncadd %s158, %s165
          %s167 = smul.addr %s162, 2
          %s168 = sadd.s32 %s163, %s167
          %s169 = smul.addr %s168, 128
          %s170 = scalar_lea.hbm %s0, %s169
          %s171 = sshll.u32 %s161, 4
          %s172 = int_to_ptr.vmem [resolvable:$true] %s171
          %177 = dma.hbm_to_vmem [thread:$0]  %s170, 512, %s172, %s158, 256, 256, 16
        $region24: #{linear_forward.1} parent=19 // pred_fallthru
          _
      $region20: #{linear_forward.1} parent=5 // pred_fallthru
        _
      %p178 = scmp.le.s32.totalorder 1, %s15
      %p179 = scmp.lt.s32.totalorder %s15, 3
      %p180 = pnand %p178, %p179
      %p181 = pneg %p180
      // Predicated region
      $region25: #{linear_forward.1} parent=5 // pred_check
        _
      $region26: #{linear_forward.1} parent=5 // pred_check_branch
        %183 = sbr.rel (%p180) target = $region28
      $region27: #{linear_forward.1} parent=5 // pred_region
        %s184 = ssub.s32 %s15, 1
        %s185 = sand.u32 %s49, 1
        %s186 = scalar_lea.sflag [#allocation4], %s185
        %s187 = sand.u32 %s49, 1
        %s188 = smul.addr %s187, 32
        %s189 = scalar_lea.vmem [#allocation3], %s188
        // Predicated region
        $region29: #{linear_forward.1} parent=27 // pred_check
          %p190 = pneg %p62
        $region30: #{linear_forward.1} parent=27 // pred_check_branch
          %192 = sbr.rel (%p190) target = $region32
        $region31: #{linear_forward.1} parent=27 // pred_region
          %193 = dma.done %s186, 512
        $region32: #{linear_forward.1} parent=27 // pred_fallthru
          _
        // Predicated region
        $region33: #{linear_forward.1} parent=27 // pred_check
          %p194 = pneg %p90
        $region34: #{linear_forward.1} parent=27 // pred_check_branch
          %196 = sbr.rel (%p194) target = $region36
        $region35: #{linear_forward.1} parent=27 // pred_region
          %197 = dma.done [#allocation7], 2048
        $region36: #{linear_forward.1} parent=27 // pred_fallthru
          _
        %s198 = sand.u32 %s49, 1
        %s199 = scalar_lea.sflag [#allocation4], %s198
        %s200 = sand.u32 %s49, 1
        %s201 = smul.addr %s200, 32
        %s202 = scalar_lea.vmem [#allocation3], %s201
        %p203 = pneg %p62
        %p204 = pneg %p59
        %p205 = pneg %p90
        %p206 = pneg %p87
        %p207 = pneg %p118
        %p208 = pneg %p115
        %s209 = sand.u32 %s105, 1
        %s210 = scalar_lea.sflag [#allocation5], %s209
        %s211 = sand.u32 %s105, 1
        %s212 = smul.addr %s211, 8
        %s213 = scalar_lea.vmem [#allocation8], %s212
        %s214 = smul.u32 2, %s25
        %s215 = smul.u32 2, %s27
        %s216 = smul.u32 32, %s27
        %s217 = smul.u32 2, %s25
        %p219 = scmp.eq.s32.totalorder %s27, 0
        // Predicated region
        $region37: #{linear_forward.1} parent=27 // pred_check
          %p220 = pneg %p219
        $region38: #{linear_forward.1} parent=27 // pred_check_branch
          %222 = sbr.rel (%p220) target = $region40
        $region39: #{linear_forward.1} parent=27 // pred_region
          %223 = vst [vmem:[#allocation2] sm:$0xff] 0.0
          %224 = vst [vmem:[#allocation2 + $0x8] sm:$0xff] 0.0
        $region40: #{linear_forward.1} parent=27 // pred_fallthru
          _
        %v225 = vld [vmem:[#allocation2] sm:$0xff]
        %v226 = vld [vmem:[#allocation2 + $0x8] sm:$0xff]
        %v227 = vld [vmem:[%s189] sm:$0xff]
        %v228 = vld [vmem:[%s189 + $0x8] sm:$0xff]
        %v229 = vld [vmem:[%s189 + $0x10] sm:$0xff]
        %v230 = vld [vmem:[%s189 + $0x18] sm:$0xff]
        %v231 = vpack.c.bf16 %v229, %v227
        %v232 = vpack.c.bf16 %v230, %v228
        %v233 = vld [vmem:[#allocation6] sm:$0xf]
        %v234 = vld [vmem:[#allocation6 + $0x4] sm:$0xf]
        %v235 = vld [vmem:[#allocation6 + $0x8] sm:$0xf]
        %v236 = vld [vmem:[#allocation6 + $0xc] sm:$0xf]
        %v237 = vld [vmem:[#allocation6 + $0x10] sm:$0xf]
        %v238 = vld [vmem:[#allocation6 + $0x14] sm:$0xf]
        %v239 = vld [vmem:[#allocation6 + $0x18] sm:$0xf]
        %v240 = vld [vmem:[#allocation6 + $0x1c] sm:$0xf]
        %v241 = vld [vmem:[#allocation6 + $0x20] sm:$0xf]
        %v242 = vld [vmem:[#allocation6 + $0x24] sm:$0xf]
        %v243 = vld [vmem:[#allocation6 + $0x28] sm:$0xf]
        %v244 = vld [vmem:[#allocation6 + $0x2c] sm:$0xf]
        %v245 = vld [vmem:[#allocation6 + $0x30] sm:$0xf]
        %v246 = vld [vmem:[#allocation6 + $0x34] sm:$0xf]
        %v247 = vld [vmem:[#allocation6 + $0x38] sm:$0xf]
        %v248 = vld [vmem:[#allocation6 + $0x3c] sm:$0xf]
        %v249 = vld [vmem:[#allocation6 + $0x40] sm:$0xf]
        %v250 = vld [vmem:[#allocation6 + $0x44] sm:$0xf]
        %v251 = vld [vmem:[#allocation6 + $0x48] sm:$0xf]
        %v252 = vld [vmem:[#allocation6 + $0x4c] sm:$0xf]
        %v253 = vld [vmem:[#allocation6 + $0x50] sm:$0xf]
        %v254 = vld [vmem:[#allocation6 + $0x54] sm:$0xf]
        %v255 = vld [vmem:[#allocation6 + $0x58] sm:$0xf]
        %v256 = vld [vmem:[#allocation6 + $0x5c] sm:$0xf]
        %v257 = vld [vmem:[#allocation6 + $0x60] sm:$0xf]
        %v258 = vld [vmem:[#allocation6 + $0x64] sm:$0xf]
        %v259 = vld [vmem:[#allocation6 + $0x68] sm:$0xf]
        %v260 = vld [vmem:[#allocation6 + $0x6c] sm:$0xf]
        %v261 = vld [vmem:[#allocation6 + $0x70] sm:$0xf]
        %v262 = vld [vmem:[#allocation6 + $0x74] sm:$0xf]
        %v263 = vld [vmem:[#allocation6 + $0x78] sm:$0xf]
        %v264 = vld [vmem:[#allocation6 + $0x7c] sm:$0xf]
        %v297 = vunpack.c.l.b16 %v233
        %v298 = vunpack.c.l.b16 %v234
        %v299 = vunpack.c.l.b16 %v235
        %v300 = vunpack.c.l.b16 %v236
        %v301 = vunpack.c.l.b16 %v237
        %v302 = vunpack.c.l.b16 %v238
        %v303 = vunpack.c.l.b16 %v239
        %v304 = vunpack.c.l.b16 %v240
        %v305 = vunpack.c.l.b16 %v241
        %v306 = vunpack.c.l.b16 %v242
        %v307 = vunpack.c.l.b16 %v243
        %v308 = vunpack.c.l.b16 %v244
        %v309 = vunpack.c.l.b16 %v245
        %v310 = vunpack.c.l.b16 %v246
        %v311 = vunpack.c.l.b16 %v247
        %v312 = vunpack.c.l.b16 %v248
        %v313 = vunpack.c.l.b16 %v249
        %v314 = vunpack.c.l.b16 %v250
        %v315 = vunpack.c.l.b16 %v251
        %v316 = vunpack.c.l.b16 %v252
        %v317 = vunpack.c.l.b16 %v253
        %v318 = vunpack.c.l.b16 %v254
        %v319 = vunpack.c.l.b16 %v255
        %v320 = vunpack.c.l.b16 %v256
        %v321 = vunpack.c.l.b16 %v257
        %v322 = vunpack.c.l.b16 %v258
        %v323 = vunpack.c.l.b16 %v259
        %v324 = vunpack.c.l.b16 %v260
        %v325 = vunpack.c.l.b16 %v261
        %v326 = vunpack.c.l.b16 %v262
        %v327 = vunpack.c.l.b16 %v263
        %v328 = vunpack.c.l.b16 %v264
        %v329 = vpack.c.b16 %v298, %v297
        %v330 = vpack.c.b16 %v300, %v299
        %v331 = vpack.c.b16 %v302, %v301
        %v332 = vpack.c.b16 %v304, %v303
        %v333 = vpack.c.b16 %v306, %v305
        %v334 = vpack.c.b16 %v308, %v307
        %v335 = vpack.c.b16 %v310, %v309
        %v336 = vpack.c.b16 %v312, %v311
        %v337 = vpack.c.b16 %v314, %v313
        %v338 = vpack.c.b16 %v316, %v315
        %v339 = vpack.c.b16 %v318, %v317
        %v340 = vpack.c.b16 %v320, %v319
        %v341 = vpack.c.b16 %v322, %v321
        %v342 = vpack.c.b16 %v324, %v323
        %v343 = vpack.c.b16 %v326, %v325
        %v344 = vpack.c.b16 %v328, %v327
        %361 = vmatprep.subr.bf16.mxu0 0
        %362 = vmatpush1.bf16.msra.mxu0 %v329
        %363 = vmatprep.subr.bf16.mxu0 0
        %364 = vmatpush1.bf16.msra.mxu0 %v330
        %365 = vmatprep.subr.bf16.mxu0 0
        %366 = vmatpush1.bf16.msra.mxu0 %v331
        %367 = vmatprep.subr.bf16.mxu0 0
        %368 = vmatpush1.bf16.msra.mxu0 %v332
        %369 = vmatprep.subr.bf16.mxu0 0
        %370 = vmatpush1.bf16.msra.mxu0 %v333
        %371 = vmatprep.subr.bf16.mxu0 0
        %372 = vmatpush1.bf16.msra.mxu0 %v334
        %373 = vmatprep.subr.bf16.mxu0 0
        %374 = vmatpush1.bf16.msra.mxu0 %v335
        %375 = vmatprep.subr.bf16.mxu0 0
        %376 = vmatpush1.bf16.msra.mxu0 %v336
        %377 = vmatprep.subr.bf16.mxu0 0
        %378 = vmatpush1.bf16.msra.mxu0 %v337
        %379 = vmatprep.subr.bf16.mxu0 0
        %380 = vmatpush1.bf16.msra.mxu0 %v338
        %381 = vmatprep.subr.bf16.mxu0 0
        %382 = vmatpush1.bf16.msra.mxu0 %v339
        %383 = vmatprep.subr.bf16.mxu0 0
        %384 = vmatpush1.bf16.msra.mxu0 %v340
        %385 = vmatprep.subr.bf16.mxu0 0
        %386 = vmatpush1.bf16.msra.mxu0 %v341
        %387 = vmatprep.subr.bf16.mxu0 0
        %388 = vmatpush1.bf16.msra.mxu0 %v342
        %389 = vmatprep.subr.bf16.mxu0 0
        %390 = vmatpush1.bf16.msra.mxu0 %v343
        %391 = vmatprep.subr.bf16.mxu0 0
        %392 = vmatpush1.bf16.msra.mxu0 %v344
        %393 = vmatprep.mubr.bf16.mxu0 %v232
        %394 = vmatmul.mubr.bf16.gmra.mrb[0].mxu0 %v231
        %v395 = vpop.f32.mrb[0].mxu0
        %v396 = vadd.f32 0.0, %v395
        %v397 = vpop.f32.mrb[0].mxu0
        %v398 = vpop.f32.mrb[0].mxu0
        %v399 = vadd.f32 0.0, %v398
        %v400 = vpop.f32.mrb[0].mxu0
        %401 = vdwg.mxu0
        %v402 = vadd.f32 %v225, %v396
        %v403 = vadd.f32 %v226, %v399
        %404 = vst [vmem:[#allocation2] sm:$0xff] %v402
        %405 = vst [vmem:[#allocation2 + $0x8] sm:$0xff] %v403
        // Predicated region
        $region41: #{linear_forward.1} parent=27 // pred_check
          %p406 = pneg %p219
        $region42: #{linear_forward.1} parent=27 // pred_check_branch
          %408 = sbr.rel (%p406) target = $region44
        $region43: #{linear_forward.1} parent=27 // pred_region
          %v409 = vld [vmem:[#allocation2] sm:$0xff]
          %v410 = vld [vmem:[#allocation2 + $0x8] sm:$0xff]
          %v411 = vpack.c.bf16 %v410, %v409
          %v413 = vunpack.c.l.b16 %v411
          %v414 = vunpack.c.h.b16 %v411
          %v415 = vpack.c.b16 %v413, %v413
          %v416 = vpack.c.b16 %v414, %v414
          %419 = vst [vmem:[%s213] sm:$0xf] %v415
          %420 = vst [vmem:[%s213 + $0x4] sm:$0xf] %v416
        $region44: #{linear_forward.1} parent=27 // pred_fallthru
          _
        %s421 = sand.u32 %s105, 1
        %s422 = scalar_lea.sflag [#allocation5], %s421
        %s423 = sand.u32 %s105, 1
        %s424 = smul.addr %s423, 8
        %s425 = scalar_lea.vmem [#allocation8], %s424
        // Predicated region
        $region45: #{linear_forward.1} parent=27 // pred_check
          %p426 = pneg %p115
        $region46: #{linear_forward.1} parent=27 // pred_check_branch
          %428 = sbr.rel (%p426) target = $region48
        $region47: #{linear_forward.1} parent=27 // pred_region
          %s429 = smul.u32 2, %s25
          %s431 = ssub.s32 128, 128
          %432 = vsyncadd %s422, %s431
          %s433 = sadd.s32 %s26, %s429
          %s434 = smul.addr %s433, 64
          %s435 = scalar_lea.hbm %s2, %s434
          %s436 = sshll.u32 %s425, 4
          %s437 = int_to_ptr.vmem [resolvable:$true] %s436
          %442 = dma.vmem_to_hbm [thread:$0]  %s437, 128, %s435, %s422, 64, 64, 4
        $region48: #{linear_forward.1} parent=27 // pred_fallthru
          _
      $region28: #{linear_forward.1} parent=5 // pred_fallthru
        _
      %p443 = scmp.le.s32.totalorder 2, %s15
      // Predicated region
      $region49: #{linear_forward.1} parent=5 // pred_check
        %p444 = pneg %p443
      $region50: #{linear_forward.1} parent=5 // pred_check_branch
        %446 = sbr.rel (%p444) target = $region52
      $region51: #{linear_forward.1} parent=5 // pred_region
        %s447 = ssub.s32 %s15, 2
        // Predicated region
        $region53: #{linear_forward.1} parent=51 // pred_check
          %p448 = pneg %p121
        $region54: #{linear_forward.1} parent=51 // pred_check_branch
          %450 = sbr.rel (%p448) target = $region56
        $region55: #{linear_forward.1} parent=51 // pred_region
          %s451 = sand.u32 %s106, 1
          %s452 = scalar_lea.sflag [#allocation5], %s451
          %s453 = sand.u32 %s106, 1
          %s454 = smul.addr %s453, 8
          %s455 = scalar_lea.vmem [#allocation8], %s454
          %456 = dma.done %s452, 128
        $region56: #{linear_forward.1} parent=51 // pred_fallthru
          _
      $region52: #{linear_forward.1} parent=5 // pred_fallthru
        _
    $region6: #{linear_forward.1} parent=1 // loop_footer
      %s19 = sadd.s32 1, %s15
    $region7: #{linear_forward.1} parent=1 // loop_footer_branch
      %14 = sbr.rel target = $region3
    $region8: #{linear_forward.1} parent=1 // loop_exit
      _
    %457 = vsyncpa [#allocation4], 1
    %s458 = scalar_lea.sflag [#allocation4], 1
    %459 = vsyncpa %s458, 1
    %460 = vsyncpa [#allocation7], 1
    %461 = vsyncpa [#allocation5], 1
    %s462 = scalar_lea.sflag [#allocation5], 1
    %463 = vsyncpa %s462, 1

</llo_original>
